<compile_context>
chip_gen: v7x
topology: tpu7x:2x2x1
jax: 0.10.0
libtpu: 0.0.40
codegen_flags: <defaults>
</compile_context>

<pallas_src>
import functools

import jax
import jax.numpy as jnp
from jax.experimental import pallas as pl
from jax.experimental.pallas import tpu as pltpu

hidden_size = 64  # module spec


def _round_up(n, m):
    return ((n + m - 1) // m) * m


def _peda_lstm_kernel(x_ref, wih_ref, bias_ref, wlin_ref, blin_ref, out_ref,
                      *, gate_dtype):
    """One batch tile: fused LSTM cell (seq_len=1, zero state) + linear head."""
    H = wlin_ref.shape[1]

    # In-kernel cast rides free VPU slack (no wrapper-side HBM rewrite of x).
    # TODO(synk): feeding bf16 x from upstream would also halve the dominant
    # HBM read stream (most valuable on v5e).
    x = x_ref[...].astype(wih_ref.dtype)                        # (TB, I)

    # Single MXU matmul for the 3 live gates; f32 accumulation.
    gates = jnp.dot(x, wih_ref[...], preferred_element_type=jnp.float32)
    gates = gates + bias_ref[...]                               # (TB, 3H)

    # One EUP tanh over all 3H lanes.  The i/o pre-activations were pre-scaled
    # by 0.5 in prepare_params, so sigmoid(z) == 0.5*tanh(z/2) + 0.5 here.
    # gate_dtype=bf16 roughly doubles EUP throughput on v6e/v7x; use f32 on v5e.
    t = jnp.tanh(gates.astype(gate_dtype)).astype(jnp.float32)

    io = t[:, : 2 * H] * 0.5 + 0.5      # aligned 128-lane slice when H == 64
    i_g = io[:, :H]
    o_g = io[:, H:]
    g_g = t[:, 2 * H:]
    # TODO(synk): if bundle dumps show vsel/relayout filler around these 64-lane
    # slices (3H=192 splits vregs), realign with pltpu.roll instead of slicing.

    c = i_g * g_g                                               # c0 == 0
    h = o_g * jnp.tanh(c.astype(gate_dtype)).astype(jnp.float32)  # (TB, H)

    # N=1 linear head as VPU multiply + XLU lane reduce; store lane-dense (1, TB).
    y = jnp.sum(h * wlin_ref[...], axis=-1)[None, :] + blin_ref[...]
    out_ref[...] = y.astype(out_ref.dtype)                      # (1, TB)


def prepare_params(w_ih, w_hh, b_ih, b_hh, w_lin, b_lin, *, mxu_dtype=jnp.float32):
    """One-time weight repack.  Do NOT call on the per-forward path.

    Drops the dead forget gate, reorders remaining gates to [i | o | g],
    pre-scales the i/o rows by 0.5 (so the kernel's sigmoid is a single tanh),
    pre-transposes to (I, 3H) for the MXU and folds b_ih + b_hh.

    Valid for the pedaLSTM forward as written: seq_len == 1 with zero initial
    (h0, c0); w_hh is shape-checked but mathematically dead.

    mxu_dtype=bf16 is a valid fast path on ALL generations (v5e/v6e/v7x MXUs
    run bf16 at full rate); gate math in the kernel stays f32 unless the
    caller also passes gate_dtype=bf16 (recommended on v6e/v7x only).
    """
    H4, _ = w_ih.shape
    H = H4 // 4
    assert H4 == 4 * H and w_hh.shape == (4 * H, H), "unexpected LSTM weight shapes"

    def gate(a, g):                             # PyTorch gate order: i, f, g, o
        return a[g * H:(g + 1) * H]

    b = b_ih + b_hh
    # Rows reordered to [i | o | g]; f pruned; i/o pre-scaled by 0.5 (exact).
    w_sel = jnp.concatenate(
        [0.5 * gate(w_ih, 0), 0.5 * gate(w_ih, 3), gate(w_ih, 2)], axis=0)
    b_sel = jnp.concatenate(
        [0.5 * gate(b, 0), 0.5 * gate(b, 3), gate(b, 2)], axis=0)

    wih_t = jnp.transpose(w_sel).astype(mxu_dtype)         # (I, 3H) MXU operand
    bias = b_sel.reshape(1, 3 * H).astype(jnp.float32)     # (1, 3H) f32
    wlin_row = w_lin.reshape(1, H).astype(jnp.float32)     # (1, H)  f32
    blin = b_lin.reshape(1, 1).astype(jnp.float32)         # (1, 1)  f32
    return wih_t, bias, wlin_row, blin


@functools.partial(jax.jit, static_argnames=("block_b", "gate_dtype"))
def peda_lstm_forward(x, wih_t, bias, wlin_row, blin, *,
                      block_b=4096, gate_dtype=jnp.float32):
    """x: (B, I) any float dtype.  Returns (B,) float32, matching pedaLSTM.forward."""
    B, I = x.shape
    H = wlin_row.shape[1]
    if B == 0:
        return jnp.zeros((0,), jnp.float32)

    # Batch tile: multiple of 8 sublanes; cap at 8192 (returns flatten past ~8K
    # and this keeps the f32 gate intermediates well inside v7x's 64 MiB VMEM).
    block_b = min(max(8, _round_up(int(block_b), 8)), 8192)
    TB = min(block_b, _round_up(B, 8))
    num_blocks = pl.cdiv(B, TB)           # ragged last block: no wrapper-side pad

    # VMEM budget: double-buffered x / out tiles + resident weights + headroom
    # for the (TB, 3H) f32 gate intermediates.
    weight_bytes = 4 * (I * 3 * H + 4 * H + 4)
    row_bytes = 4 * (2 * I + 2 + 6 * 3 * H)
    vmem_limit = int(min(max(2 * (weight_bytes + TB * row_bytes), 16 << 20), 64 << 20))

    rows = num_blocks * TB
    cost = pl.CostEstimate(
        flops=int(2 * rows * I * 3 * H + 8 * rows * H),
        transcendentals=int(4 * rows * H),
        bytes_accessed=int(x.size * x.dtype.itemsize + rows * 4
                           + wih_t.size * wih_t.dtype.itemsize
                           + (bias.size + wlin_row.size + blin.size) * 4),
    )

    out = pl.pallas_call(
        functools.partial(_peda_lstm_kernel, gate_dtype=gate_dtype),
        out_shape=jax.ShapeDtypeStruct((num_blocks, TB), jnp.float32),
        grid=(num_blocks,),
        in_specs=[
            pl.BlockSpec((TB, I), lambda b: (b, 0)),        # batch tile (pipelined)
            pl.BlockSpec((I, 3 * H), lambda b: (0, 0)),     # resident gate weights
            pl.BlockSpec((1, 3 * H), lambda b: (0, 0)),     # folded (pre-scaled) bias
            pl.BlockSpec((1, H), lambda b: (0, 0)),         # linear-head row
            pl.BlockSpec((1, 1), lambda b: (0, 0)),         # linear-head bias
        ],
        out_specs=pl.BlockSpec((1, TB), lambda b: (b, 0)),  # lane-dense output row
        compiler_params=pltpu.CompilerParams(
            # TODO(synk): on v7x, if the profile shows one busy TensorCore,
            # switch this axis to pltpu.CORE_PARALLEL (or pl.core_map).
            dimension_semantics=("parallel",),
            vmem_limit_bytes=vmem_limit,
        ),
        cost_estimate=cost,
    )(x, wih_t, bias, wlin_row, blin)

    # (num_blocks, TB) and (B,) share flat element order; garbage tail rows of a
    # ragged last block are row-independent and sliced off here.
    return out.reshape(-1)[:B]


def init_params(key, input_size, hidden):
    """PyTorch-style uniform(-1/sqrt(H), 1/sqrt(H)) init, deterministic."""
    k = 1.0 / jnp.sqrt(jnp.float32(hidden))
    keys = jax.random.split(key, 6)
    u = lambda kk, shape: jax.random.uniform(kk, shape, jnp.float32, -k, k)
    w_ih = u(keys[0], (4 * hidden, input_size))
    w_hh = u(keys[1], (4 * hidden, hidden))
    b_ih = u(keys[2], (4 * hidden,))
    b_hh = u(keys[3], (4 * hidden,))
    w_lin = u(keys[4], (1, hidden))
    b_lin = u(keys[5], (1,))
    return w_ih, w_hh, b_ih, b_hh, w_lin, b_lin


def reference_forward(x, w_ih, w_hh, b_ih, b_hh, w_lin, b_lin):
    """Pure-JAX reference (same math as PyTorch seq_len=1 LSTM + Linear)."""
    H = w_hh.shape[1]
    gates = x @ w_ih.T + b_ih + b_hh
    i_g = jax.nn.sigmoid(gates[:, 0 * H:1 * H])
    g_g = jnp.tanh(gates[:, 2 * H:3 * H])
    o_g = jax.nn.sigmoid(gates[:, 3 * H:4 * H])
    c = i_g * g_g
    h = o_g * jnp.tanh(c)
    return (h @ w_lin.T + b_lin)[:, 0]


if __name__ == "__main__":
    key = jax.random.PRNGKey(0)
    B, input_size = 8, 16

    pk, xk = jax.random.split(key)
    raw = init_params(pk, input_size, hidden_size)
    x = jax.random.normal(xk, (B, input_size), jnp.float32)
    y_ref = reference_forward(x, *raw)

    # f32 path: tight agreement with the pure-JAX (PyTorch-equivalent) reference.
    params_f32 = prepare_params(*raw, mxu_dtype=jnp.float32)
    y = jax.block_until_ready(peda_lstm_forward(x, *params_f32))
    assert y.shape == (B,)
    assert jnp.allclose(y, y_ref, atol=1e-4, rtol=1e-4), (y, y_ref)

    # Multi-block grid + ragged last block (no wrapper-side padding of x).
    B2 = 300
    x2 = jax.random.normal(jax.random.PRNGKey(1), (B2, input_size), jnp.float32)
    y2 = jax.block_until_ready(peda_lstm_forward(x2, *params_f32, block_b=128))
    y2_ref = reference_forward(x2, *raw)
    assert y2.shape == (B2,)
    assert jnp.allclose(y2, y2_ref, atol=1e-4, rtol=1e-4)

    # bf16 MXU operands + bf16 transcendentals (v6e/v7x fast path; also runs on v5e).
    params_bf16 = prepare_params(*raw, mxu_dtype=jnp.bfloat16)
    y_bf16 = jax.block_until_ready(
        peda_lstm_forward(x, *params_bf16, gate_dtype=jnp.bfloat16))
    assert jnp.allclose(y_bf16, y_ref, atol=1e-1, rtol=1e-1), (y_bf16, y_ref)

    print("KERNEL_OK")
</pallas_src>

<mosaic_0001>
module attributes {stable_mosaic.version = 11 : i64} {
  func.func @_peda_lstm_kernel(%arg0: i32, %arg1: memref<8x16xf32, #tpu.memory_space<vmem>>, %arg2: memref<16x192xf32, #tpu.memory_space<vmem>>, %arg3: memref<1x192xf32, #tpu.memory_space<vmem>>, %arg4: memref<1x64xf32, #tpu.memory_space<vmem>>, %arg5: memref<1x1xf32, #tpu.memory_space<vmem>>, %arg6: memref<1x8xf32, #tpu.memory_space<vmem>>) attributes {dimension_semantics = [#tpu.dimension_semantics<parallel>], iteration_bounds = array<i64: 1>, scalar_prefetch = 0 : i64, scratch_operands = 0 : i64, tpu.core_type = #tpu.core_type<tc>, window_params = [{transform_indices = @transform_0, window_bounds = array<i64: 8, 16>}, {pipeline_mode = #tpu.pipeline_mode<synchronous>, transform_indices = @transform_1, window_bounds = array<i64: 16, 192>}, {pipeline_mode = #tpu.pipeline_mode<synchronous>, transform_indices = @transform_2, window_bounds = array<i64: 1, 192>}, {pipeline_mode = #tpu.pipeline_mode<synchronous>, transform_indices = @transform_3, window_bounds = array<i64: 1, 64>}, {pipeline_mode = #tpu.pipeline_mode<synchronous>, transform_indices = @transform_4, window_bounds = array<i64: 1, 1>}, {transform_indices = @transform_5, window_bounds = array<i64: 1, 8>}]} {
    %c0 = arith.constant 0 : index
    %c0_0 = arith.constant 0 : index
    %0 = vector.load %arg1[%c0, %c0_0] : memref<8x16xf32, #tpu.memory_space<vmem>>, vector<8x16xf32>
    %c0_1 = arith.constant 0 : index
    %c0_2 = arith.constant 0 : index
    %1 = vector.load %arg2[%c0_1, %c0_2] : memref<16x192xf32, #tpu.memory_space<vmem>>, vector<16x192xf32>
    %cst = arith.constant dense<0.000000e+00> : vector<8x192xf32>
    %2 = tpu.matmul %0, %1, %cst {dimension_numbers = #tpu.dot_dimension_numbers<[1], [0], [0], [1], [0, 0, 1, 1], [], []>} : vector<8x16xf32>, vector<16x192xf32>, vector<8x192xf32> -> vector<8x192xf32>
    %c0_3 = arith.constant 0 : index
    %c0_4 = arith.constant 0 : index
    %3 = vector.load %arg3[%c0_3, %c0_4] : memref<1x192xf32, #tpu.memory_space<vmem>>, vector<1x192xf32>
    %4 = vector.broadcast %3 : vector<1x192xf32> to vector<8x192xf32>
    %5 = arith.addf %2, %4 : vector<8x192xf32>
    %6 = math.tanh %5 : vector<8x192xf32>
    %7 = vector.extract_strided_slice %6 {offsets = [0, 0], sizes = [8, 128], strides = [1, 1]} : vector<8x192xf32> to vector<8x128xf32>
    %cst_5 = arith.constant 5.000000e-01 : f32
    %8 = vector.broadcast %cst_5 : f32 to vector<8x128xf32>
    %9 = arith.mulf %7, %8 : vector<8x128xf32>
    %cst_6 = arith.constant 5.000000e-01 : f32
    %10 = vector.broadcast %cst_6 : f32 to vector<8x128xf32>
    %11 = arith.addf %9, %10 : vector<8x128xf32>
    %12 = vector.extract_strided_slice %11 {offsets = [0, 0], sizes = [8, 64], strides = [1, 1]} : vector<8x128xf32> to vector<8x64xf32>
    %13 = vector.extract_strided_slice %11 {offsets = [0, 64], sizes = [8, 64], strides = [1, 1]} : vector<8x128xf32> to vector<8x64xf32>
    %14 = vector.extract_strided_slice %6 {offsets = [0, 128], sizes = [8, 64], strides = [1, 1]} : vector<8x192xf32> to vector<8x64xf32>
    %15 = arith.mulf %12, %14 : vector<8x64xf32>
    %16 = math.tanh %15 : vector<8x64xf32>
    %17 = arith.mulf %13, %16 : vector<8x64xf32>
    %c0_7 = arith.constant 0 : index
    %c0_8 = arith.constant 0 : index
    %18 = vector.load %arg4[%c0_7, %c0_8] : memref<1x64xf32, #tpu.memory_space<vmem>>, vector<1x64xf32>
    %19 = vector.broadcast %18 : vector<1x64xf32> to vector<8x64xf32>
    %20 = arith.mulf %17, %19 : vector<8x64xf32>
    %cst_9 = arith.constant dense<0.000000e+00> : vector<8xf32>
    %21 = vector.multi_reduction <add>, %20, %cst_9 [1] : vector<8x64xf32> to vector<8xf32>
    %22 = vector.shape_cast %21 : vector<8xf32> to vector<1x8xf32>
    %c0_10 = arith.constant 0 : index
    %c0_11 = arith.constant 0 : index
    %23 = vector.load %arg5[%c0_10, %c0_11] : memref<1x1xf32, #tpu.memory_space<vmem>>, vector<1x1xf32>
    %24 = vector.broadcast %23 : vector<1x1xf32> to vector<1x8xf32>
    %25 = arith.addf %22, %24 : vector<1x8xf32>
    %c0_12 = arith.constant 0 : index
    %c0_13 = arith.constant 0 : index
    %26 = vector.load %arg6[%c0_12, %c0_13] : memref<1x8xf32, #tpu.memory_space<vmem>>, vector<1x8xf32>
    tpu.vector_store %arg6[%c0_12, %c0_13], %25 {strides = array<i32>} : memref<1x8xf32, #tpu.memory_space<vmem>>, vector<1x8xf32>,
    return
  }
  func.func @transform_0(%arg0: i32) -> (i32, i32) {
    %c0_i32 = arith.constant 0 : i32
    %c0_i32_0 = arith.constant 0 : i32
    return %arg0, %c0_i32 : i32, i32
  }
  func.func @transform_1(%arg0: i32) -> (i32, i32) {
    %c0_i32 = arith.constant 0 : i32
    %c0_i32_0 = arith.constant 0 : i32
    %c0_i32_1 = arith.constant 0 : i32
    return %c0_i32, %c0_i32_0 : i32, i32
  }
  func.func @transform_2(%arg0: i32) -> (i32, i32) {
    %c0_i32 = arith.constant 0 : i32
    %c0_i32_0 = arith.constant 0 : i32
    %c0_i32_1 = arith.constant 0 : i32
    return %c0_i32, %c0_i32_0 : i32, i32
  }
  func.func @transform_3(%arg0: i32) -> (i32, i32) {
    %c0_i32 = arith.constant 0 : i32
    %c0_i32_0 = arith.constant 0 : i32
    %c0_i32_1 = arith.constant 0 : i32
    return %c0_i32, %c0_i32_0 : i32, i32
  }
  func.func @transform_4(%arg0: i32) -> (i32, i32) {
    %c0_i32 = arith.constant 0 : i32
    %c0_i32_0 = arith.constant 0 : i32
    %c0_i32_1 = arith.constant 0 : i32
    return %c0_i32, %c0_i32_0 : i32, i32
  }
  func.func @transform_5(%arg0: i32) -> (i32, i32) {
    %c0_i32 = arith.constant 0 : i32
    %c0_i32_0 = arith.constant 0 : i32
    return %arg0, %c0_i32 : i32, i32
  }
}

</mosaic_0001>

<llo_original>
// kernel: peda_lstm_forward.1
$region0: #{peda_lstm_forward.1}
  #allocation0 [shape = 'u32[]', space=smem, size = 0x4, offset = 0x4, fixed_abs, tag = 'smem constant byte address 0x4 - core index']
  #allocation1 [shape = 'u32[144,128]{1,0:T(1,128)}', space=vmem, size = 0x12000, scoped, tag = 'internal scratch']
  #allocation2 [shape = 'f32[1,1]{1,0:T(1,128)S(1)}', space=vmem, size = 0x200, scoped, tag = 'scoped memory for peda_lstm_forward.1']
  %s0 = inlined_call_operand.hbm [shape: f32[8,16], index: 0, kind: input, shape index: {}]
  %s1 = inlined_call_operand.hbm [shape: f32[16,192], index: 1, kind: input, shape index: {}]
  %s2 = inlined_call_operand.vmem [shape: f32[1,192], index: 2, kind: input, shape index: {}]
  %s3 = inlined_call_operand.vmem [shape: f32[1,64], index: 3, kind: input, shape index: {}]
  %s4 = inlined_call_operand.<no memory space> [shape: f32[1,1], index: 4, kind: input, shape index: {}]
  %s5 = inlined_call_operand.hbm [shape: f32[1,8], index: 5, kind: output, shape index: {}]
  %s6 = sld [smem:[#allocation0]]
  $region38: #{peda_lstm_forward.1} parent=0
    _
  %s8 = ssub.s32 1, %s6
  %s9 = scalar_select 0, %s8, %s6
  %v10 = vstv %s4
  %11 = vst [vmem:[#allocation2] sm:$0x1] %v10
  $region1: #{peda_lstm_forward.1} parent=0
    #allocation3 [shape = 'u8[4096]{0}', space=vmem, size = 0x1000, scoped, tag = 'input window, operand 0, single buffered']
    #allocation4 [shape = 's32[1]{0}', space=sflag, size = 0x4, scoped, tag = 'scoped memory for peda_lstm_forward.1']
    #allocation5 [shape = 's32[1]{0}', space=sflag, size = 0x4, scoped, tag = 'scoped memory for peda_lstm_forward.1']
    #allocation6 [shape = 'u8[16384]{0}', space=vmem, size = 0x4000, scoped, tag = 'input window, operand 1, single buffered']
    #allocation7 [shape = 's32[1]{0}', space=sflag, size = 0x4, scoped, tag = 'scoped memory for peda_lstm_forward.1']
    #allocation8 [shape = 'u8[512]{0}', space=vmem, size = 0x400, scoped, tag = 'output window, operand 0, single buffered']
    %12 = vsyncpa [#allocation4], 0
    %13 = vsyncpa [#allocation7], 0
    %14 = vsyncpa [#allocation5], 0
    // Predicated region
    $region2: #{peda_lstm_forward.1} parent=1 // pred_check
      _
    $region3: #{peda_lstm_forward.1} parent=1 // pred_check_branch
      %16 = sbr.rel (0) target = $region5
    $region4: #{peda_lstm_forward.1} parent=1 // pred_region
      %s18 = ssub.s32 128, 128
      %19 = vsyncadd [#allocation4], %s18
      %s21 = sshll.u32 [#allocation3], 4
      %s22 = int_to_ptr.vmem [resolvable:$true] %s21
      %24 = dma.hbm_to_vmem [thread:$0]  %s0, 128, %s22, [#allocation4]
    $region5: #{peda_lstm_forward.1} parent=1 // pred_fallthru
      _
    // Predicated region
    $region6: #{peda_lstm_forward.1} parent=1 // pred_check
      _
    $region7: #{peda_lstm_forward.1} parent=1 // pred_check_branch
      %26 = sbr.rel (0) target = $region9
    $region8: #{peda_lstm_forward.1} parent=1 // pred_region
      %s28 = ssub.s32 512, 512
      %29 = vsyncadd [#allocation7], %s28
      %s30 = sshll.u32 [#allocation6], 4
      %s31 = int_to_ptr.vmem [resolvable:$true] %s30
      %36 = dma.hbm_to_vmem [thread:$0]  %s1, 512, %s31, [#allocation7], 256, 256, 16
    $region9: #{peda_lstm_forward.1} parent=1 // pred_fallthru
      _
    // Predicated region
    $region10: #{peda_lstm_forward.1} parent=1 // pred_check
      _
    $region11: #{peda_lstm_forward.1} parent=1 // pred_check_branch
      %38 = sbr.rel (0) target = $region13
    $region12: #{peda_lstm_forward.1} parent=1 // pred_region
      _
    $region13: #{peda_lstm_forward.1} parent=1 // pred_fallthru
      _
    // Predicated region
    $region14: #{peda_lstm_forward.1} parent=1 // pred_check
      _
    $region15: #{peda_lstm_forward.1} parent=1 // pred_check_branch
      %40 = sbr.rel (0) target = $region17
    $region16: #{peda_lstm_forward.1} parent=1 // pred_region
      _
    $region17: #{peda_lstm_forward.1} parent=1 // pred_fallthru
      _
    // Predicated region
    $region18: #{peda_lstm_forward.1} parent=1 // pred_check
      _
    $region19: #{peda_lstm_forward.1} parent=1 // pred_check_branch
      %42 = sbr.rel (0) target = $region21
    $region20: #{peda_lstm_forward.1} parent=1 // pred_region
      _
    $region21: #{peda_lstm_forward.1} parent=1 // pred_fallthru
      _
    // Predicated region
    $region22: #{peda_lstm_forward.1} parent=1 // pred_check
      _
    $region23: #{peda_lstm_forward.1} parent=1 // pred_check_branch
      %44 = sbr.rel (0) target = $region25
    $region24: #{peda_lstm_forward.1} parent=1 // pred_region
      %45 = dma.done [#allocation4], 128
    $region25: #{peda_lstm_forward.1} parent=1 // pred_fallthru
      _
    // Predicated region
    $region26: #{peda_lstm_forward.1} parent=1 // pred_check
      _
    $region27: #{peda_lstm_forward.1} parent=1 // pred_check_branch
      %47 = sbr.rel (0) target = $region29
    $region28: #{peda_lstm_forward.1} parent=1 // pred_region
      %48 = dma.done [#allocation7], 512
    $region29: #{peda_lstm_forward.1} parent=1 // pred_fallthru
      _
    %v49 = vld [vmem:[#allocation3] sm:$0xff]
    %v50 = vld [vmem:[#allocation6] sm:$0xff]
    %v51 = vld [vmem:[#allocation6 + $0x8] sm:$0xff]
    %v52 = vld [vmem:[#allocation6 + $0x10] sm:$0xff]
    %v53 = vld [vmem:[#allocation6 + $0x18] sm:$0xff]
    %v54 = vld [vmem:[%s2] sm:$0x3]
    %v56 = vlaneseq
    %v57 = vshrl.u32 %v56, 7
    %v58 = vsub.s32 0, %v57
    %v59 = vrot.slane %v54, %v58
    %v60 = vlaneseq
    %v61 = vshrl.u32 %v60, 7
    %v62 = vsub.s32 1, %v61
    %v63 = vrot.slane %v54, %v62
    %vm66 = vcmask 130048
    %v68 = vsel %vm66, %v49, 0
    %70 = vmatprep.subr.mxu0 %v51
    %71 = vmatpush1.msra.mxu0 %v50
    %72 = vmatprep.subr.mxu0 %v53
    %73 = vmatpush1.msra.mxu0 %v52
    %74 = vmatprep.subr.mxu0 0.0
    %75 = vmatpush1.msra.mxu0 0.0
    %76 = vmatprep.subr.mxu0 0.0
    %77 = vmatpush1.msra.mxu0 0.0
    %78 = vmatprep.subr.mxu0 0.0
    %79 = vmatpush1.msra.mxu0 0.0
    %80 = vmatprep.subr.mxu0 0.0
    %81 = vmatpush1.msra.mxu0 0.0
    %82 = vmatprep.subr.mxu0 0.0
    %83 = vmatpush1.msra.mxu0 0.0
    %84 = vmatprep.subr.mxu0 0.0
    %85 = vmatpush1.msra.mxu0 0.0
    %86 = vmatprep.subr.mxu0 0.0
    %87 = vmatpush1.msra.mxu0 0.0
    %88 = vmatprep.subr.mxu0 0.0
    %89 = vmatpush1.msra.mxu0 0.0
    %90 = vmatprep.subr.mxu0 0.0
    %91 = vmatpush1.msra.mxu0 0.0
    %92 = vmatprep.subr.mxu0 0.0
    %93 = vmatpush1.msra.mxu0 0.0
    %94 = vmatprep.subr.mxu0 0.0
    %95 = vmatpush1.msra.mxu0 0.0
    %96 = vmatprep.subr.mxu0 0.0
    %97 = vmatpush1.msra.mxu0 0.0
    %98 = vmatprep.subr.mxu0 0.0
    %99 = vmatpush1.msra.mxu0 0.0
    %100 = vmatprep.subr.mxu0 0.0
    %101 = vmatpush1.msra.mxu0 0.0
    %102 = vmatprep.subr.mxu0 0.0
    %103 = vmatpush1.msra.mxu0 0.0
    %104 = vmatprep.subr.mxu0 0.0
    %105 = vmatpush1.msra.mxu0 0.0
    %106 = vmatprep.subr.mxu0 0.0
    %107 = vmatpush1.msra.mxu0 0.0
    %108 = vmatprep.subr.mxu0 0.0
    %109 = vmatpush1.msra.mxu0 0.0
    %110 = vmatprep.subr.mxu0 0.0
    %111 = vmatpush1.msra.mxu0 0.0
    %112 = vmatprep.subr.mxu0 0.0
    %113 = vmatpush1.msra.mxu0 0.0
    %114 = vmatprep.subr.mxu0 0.0
    %115 = vmatpush1.msra.mxu0 0.0
    %116 = vmatprep.subr.mxu0 0.0
    %117 = vmatpush1.msra.mxu0 0.0
    %118 = vmatprep.subr.mxu0 0.0
    %119 = vmatpush1.msra.mxu0 0.0
    %120 = vmatprep.subr.mxu0 0.0
    %121 = vmatpush1.msra.mxu0 0.0
    %122 = vmatprep.subr.mxu0 0.0
    %123 = vmatpush1.msra.mxu0 0.0
    %124 = vmatprep.subr.mxu0 0.0
    %125 = vmatpush1.msra.mxu0 0.0
    %126 = vmatprep.subr.mxu0 0.0
    %127 = vmatpush1.msra.mxu0 0.0
    %128 = vmatprep.subr.mxu0 0.0
    %129 = vmatpush1.msra.mxu0 0.0
    %130 = vmatprep.subr.mxu0 0.0
    %131 = vmatpush1.msra.mxu0 0.0
    %132 = vmatprep.subr.mxu0 0.0
    %133 = vmatpush1.msra.mxu0 0.0
    %134 = vmatprep.mubr.f32.mxu0 0.0
    %135 = vmatmul.mubr.f32.gmra.mrb[0].mxu0 %v68
    %v136 = vpop.f32.mrb[0].mxu0
    %v137 = vadd.f32 %v59, %v136
    %v138 = vpop.f32.mrb[0].mxu0
    %v139 = vadd.f32 %v63, %v138
    %140 = vdwg.mxu0
    %v141 = vtanh.pop %v137
    %v142 = vtanh.pop %v139
    %v143 = vmul.f32 %v141, 0.5
    %v144 = vadd.f32 %v143, 0.5
    %v145 = vmul.f32 %v144, %v142
    %v146 = vtanh.pop %v145
    %148 = vrot.lane.b32.xlu0 %v146, 64
    %v149 = vpop.permute.xlu0 %148
    %v151 = vmul.f32 %v144, %v149
    %v152 = vld [vmem:[%s3] sm:$0x1]
    %v154 = vlaneseq
    %v155 = vshrl.u32 %v154, 7
    %v156 = vsub.s32 0, %v155
    %v157 = vrot.slane %v152, %v156
    %158 = vrot.lane.b32.xlu0 %v157, 64
    %v159 = vpop.permute.xlu0 %158
    %v161 = vmul.f32 %v151, %v159
    %163 = vrot.lane.b32.xlu0 %v161, 64
    %v164 = vpop.permute.xlu0 %163
    %vm166 = vcmask 523264
    %v167 = vsel %vm166, %v164, 0.0
    %168 = vadd.xlane.f32.xlu0 %v167
    %v169 = vpop.xlane.xlu0 %168
    %v170 = vld [vmem:[#allocation2] sm:$0x1]
    %172 = vset.pattern.permute.xlu0 0
    %173 = vperm.xlu0 %172, %v170
    %v174 = vpop.permute.xlu0 %173
    %v176 = vlaneseq
    %v177 = vshrl.u32 %v176, 7
    %v178 = vsub.s32 0, %v177
    %v179 = vrot.slane %v174, %v178
    %v180 = vadd.f32 %v169, %v179
    %v182 = vlaneseq
    %v183 = vand.u32 %v182, 127
    %v184 = vlaneseq
    %v185 = vshrl.u32 %v184, 7
    %v186 = vsub.s32 %v183, %v185
    %v187 = vrot.slane %v180, %v186
    %vm189 = vcmask 57344
    %190 = vst.msk [vmem:[#allocation8] sm:$0x1] %vm189, %v187
    // Predicated region
    $region30: #{peda_lstm_forward.1} parent=1 // pred_check
      _
    $region31: #{peda_lstm_forward.1} parent=1 // pred_check_branch
      %192 = sbr.rel (0) target = $region33
    $region32: #{peda_lstm_forward.1} parent=1 // pred_region
      %s194 = ssub.s32 16, 16
      %195 = vsyncadd [#allocation5], %s194
      %s197 = sshll.u32 [#allocation8], 4
      %s198 = int_to_ptr.vmem [resolvable:$true] %s197
      %200 = dma.vmem_to_hbm [thread:$0]  %s198, 16, %s5, [#allocation5]
    $region33: #{peda_lstm_forward.1} parent=1 // pred_fallthru
      _
    // Predicated region
    $region34: #{peda_lstm_forward.1} parent=1 // pred_check
      _
    $region35: #{peda_lstm_forward.1} parent=1 // pred_check_branch
      %202 = sbr.rel (0) target = $region37
    $region36: #{peda_lstm_forward.1} parent=1 // pred_region
      %203 = dma.done [#allocation5], 16
    $region37: #{peda_lstm_forward.1} parent=1 // pred_fallthru
      _
    %204 = vsyncpa [#allocation4], 1
    %205 = vsyncpa [#allocation7], 1
    %206 = vsyncpa [#allocation5], 1

</llo_original>
